<compile_context>
chip_gen: v7x
topology: tpu7x:2x2x1
jax: 0.10.0
libtpu: 0.0.40
codegen_flags: <defaults>
</compile_context>

<pallas_src>
import functools

import jax
import jax.numpy as jnp
from jax import lax
from jax.experimental import pallas as pl
from jax.experimental.pallas import tpu as pltpu


def _dch_kernel(u_i_ref, y_i_ref, u_t_ref, y_t_ref, nj_t_ref, out_ref, *,
                gamma, k_bits, batch, row_tile, need_mask):
    u_i = u_i_ref[...].astype(jnp.float32)        # (tm, K) rows of this block
    y_i = y_i_ref[...].astype(jnp.float32)        # (tm, C)
    u_t = u_t_ref[...].astype(jnp.float32)        # (K, B)  pre-transposed j side
    y_t = y_t_ref[...].astype(jnp.float32)        # (C, B)
    nj_t = nj_t_ref[...].astype(jnp.float32)      # (1, B)  hoisted j-side norms

    gamma_f = jnp.float32(gamma)
    log_gamma = jnp.log(gamma_f)
    k_half = jnp.float32(k_bits) * 0.5

    # s tile: (y_i @ y_j > 0) -> (tm, B)
    yy = jnp.dot(y_i, y_t, preferred_element_type=jnp.float32)
    s = (yy > 0.0).astype(jnp.float32)

    # Cauchy distance tile d(u_i, u_j): (tm, B).  Clamp on the norm *product*
    # keeps the PyTorch clamp semantics exactly.
    inner = jnp.dot(u_i, u_t, preferred_element_type=jnp.float32)
    ni = jnp.sqrt(jnp.sum(u_i * u_i, axis=1, keepdims=True))         # (tm, 1)
    norm = jnp.maximum(ni * nj_t, 0.0001)                            # (tm, B)
    cos = inner * pl.reciprocal(norm, approx=True)
    d = (1.0 - jnp.minimum(cos, 0.99)) * k_half

    # core = s*log(d/g) + log(1 + g/d) = (s-1)*log d + log(d+g) - s*log g
    core = (s - 1.0) * jnp.log(d) + jnp.log(d + gamma_f) - s * log_gamma

    # Quantization term: d(|u_i|, ones) is constant along j -> per-row scalar.
    abs_sum = jnp.sum(jnp.abs(u_i), axis=1, keepdims=True)           # (tm, 1)
    norm_q = jnp.maximum(ni * jnp.sqrt(jnp.float32(k_bits)), 0.0001)
    cos_q = abs_sum * pl.reciprocal(norm_q, approx=True)
    d_q = (1.0 - jnp.minimum(cos_q, 0.99)) * k_half
    quant = jnp.log(d_q + gamma_f) - log_gamma                       # (tm, 1)

    if need_mask:
        # Tail block: zero-out contributions from padded rows.
        i = pl.program_id(0)
        row_ids = lax.broadcasted_iota(jnp.int32, (row_tile, 1), 0) + i * row_tile
        rmask = (row_ids < batch).astype(jnp.float32)
        s = s * rmask
        core = core * rmask
        quant = quant * rmask

    # Per-lane partials: reduce only along the sublane (row) axis here; the
    # final tree reduction + weighted-mean algebra happen in the JAX wrapper.
    s_part = jnp.sum(s, axis=0, keepdims=True)             # (1, B)
    core_part = jnp.sum(core, axis=0, keepdims=True)       # (1, B)
    score_part = jnp.sum(s * core, axis=0, keepdims=True)  # (1, B)

    q_sum = jnp.sum(quant)                                  # scalar
    lane_ids = lax.broadcasted_iota(jnp.int32, (1, batch), 1)
    quant_row = jnp.where(lane_ids == 0, q_sum, 0.0)        # (1, B), lane 0 only

    row_sel = lax.broadcasted_iota(jnp.int32, (4, batch), 0)
    stacked = jnp.where(row_sel == 0, s_part,
              jnp.where(row_sel == 1, core_part,
              jnp.where(row_sel == 2, score_part, quant_row)))       # (4, B)
    out_ref[...] = stacked[None].astype(out_ref.dtype)               # (1, 4, B)


def _round_up(x, m):
    return ((x + m - 1) // m) * m


def _vmem_capacity_bytes():
    try:
        info = pltpu.get_tpu_info()
        cap = getattr(info, "vmem_capacity_bytes", None)
        if cap:
            return int(cap)
    except Exception:
        pass
    return 64 * 1024 * 1024  # conservative default (v7x physical VMEM)


def _vmem_limit_bytes():
    cap = _vmem_capacity_bytes()
    # ~16 MiB headroom on v7x (64 MiB physical); up to 96 MiB on v5e/v6e.
    return max(32 * 1024 * 1024, min(cap - 16 * 1024 * 1024, 96 * 1024 * 1024))


def _pick_row_tile(batch):
    # Sublane-aligned row tile in the 8..256 range (512 on 128-MiB VMEM parts);
    # the batch is padded up to a multiple of the tile (tail rows masked).
    cap = 512 if _vmem_capacity_bytes() >= 128 * 1024 * 1024 else 256
    return min(cap, _round_up(batch, 8))


def dch_loss(u, y, gamma, lambda1):
    u = u.astype(jnp.float32)
    y = y.astype(jnp.float32)
    B, K = u.shape
    C = y.shape[1]

    tm = _pick_row_tile(B)
    b_pad = _round_up(B, tm)
    n_blocks = b_pad // tm
    need_mask = b_pad != B

    if need_mask:
        u_rows = jnp.pad(u, ((0, b_pad - B), (0, 0)))
        y_rows = jnp.pad(y, ((0, b_pad - B), (0, 0)))
    else:
        u_rows, y_rows = u, y

    # Loop-invariant j-side operands: pre-transposed, norms hoisted (done once
    # by XLA outside the kernel instead of per grid step inside it).
    u_t = u.T                                                # (K, B)
    y_t = y.T                                                # (C, B)
    nj_t = jnp.sqrt(jnp.sum(u * u, axis=1))[None, :]         # (1, B)

    kernel = functools.partial(_dch_kernel, gamma=float(gamma), k_bits=K,
                               batch=B, row_tile=tm, need_mask=need_mask)

    cost = pl.CostEstimate(
        flops=2 * b_pad * B * (K + C) + 14 * b_pad * B,
        transcendentals=3 * b_pad * B + 3 * b_pad,
        # i-side read once, j-side DMA'd once (constant index map), output.
        bytes_accessed=4 * (b_pad * (K + C) + B * (K + C) + B + n_blocks * 4 * B),
    )

    partials = pl.pallas_call(
        kernel,
        out_shape=jax.ShapeDtypeStruct((n_blocks, 4, B), jnp.float32),
        grid=(n_blocks,),
        in_specs=[
            pl.BlockSpec((tm, K), lambda i: (i, 0)),   # u rows of this block
            pl.BlockSpec((tm, C), lambda i: (i, 0)),   # y rows of this block
            pl.BlockSpec((K, B), lambda i: (0, 0)),    # u^T (j side, resident)
            pl.BlockSpec((C, B), lambda i: (0, 0)),    # y^T (j side, resident)
            pl.BlockSpec((1, B), lambda i: (0, 0)),    # ||u_j|| (hoisted)
        ],
        out_specs=pl.BlockSpec((1, 4, B), lambda i: (i, 0, 0)),
        compiler_params=pltpu.CompilerParams(
            # Blocks are independent (per-block partial outputs) -> safe to
            # shard across both v7x TensorCores.
            dimension_semantics=("parallel",),
            vmem_limit_bytes=_vmem_limit_bytes(),
        ),
        cost_estimate=cost,
    )(u_rows, y_rows, u_t, y_t, nj_t)

    # Tiny finalize in plain JAX: combine partial sums, apply the class
    # balancing weight analytically with safe denominators.
    sums = jnp.sum(partials, axis=(0, 2))                    # (4,)
    s_sum, core_sum, score_sum, quant_sum = sums[0], sums[1], sums[2], sums[3]

    numel = jnp.float32(B) * jnp.float32(B)
    neg_sum = numel - s_sum
    safe_pos = jnp.where(s_sum > 0.0, s_sum, 1.0)
    safe_neg = jnp.where(neg_sum > 0.0, neg_sum, 1.0)
    # mean(w*core) with w = s*N/S + (1-s)*N/Neg  ==  sum_pos/S + sum_neg/Neg
    cauchy_mean_w = score_sum / safe_pos + (core_sum - score_sum) / safe_neg
    cauchy_mean_unw = core_sum / numel                       # degenerate: w == 1
    use_w = jnp.logical_and(s_sum > 0.0, neg_sum > 0.0)
    cauchy_mean = jnp.where(use_w, cauchy_mean_w, cauchy_mean_unw)

    quant_mean = quant_sum / jnp.float32(B)
    return cauchy_mean + jnp.float32(lambda1) * quant_mean


def _dch_loss_ref(u, y, gamma, lambda1):
    """Plain-JAX reference mirroring the PyTorch forward exactly."""
    B, K = u.shape
    one = jnp.ones((B, K), jnp.float32)
    s = (y @ y.T > 0).astype(jnp.float32)
    s_sum, neg_sum = jnp.sum(s), jnp.sum(1 - s)
    numel = jnp.float32(B * B)
    w_bal = s * numel / jnp.where(s_sum > 0, s_sum, 1.0) + \
        (1 - s) * numel / jnp.where(neg_sum > 0, neg_sum, 1.0)
    w = jnp.where(jnp.logical_and(neg_sum != 0, s_sum != 0), w_bal, jnp.ones_like(s))

    def d(hi, hj):
        inner = hi @ hj.T
        norm = jnp.sqrt(jnp.sum(hi ** 2, 1, keepdims=True)) @ jnp.sqrt(
            jnp.sum(hj ** 2, 1, keepdims=True)).T
        cos = inner / jnp.maximum(norm, 0.0001)
        return (1 - jnp.minimum(cos, 0.99)) * K / 2

    dij = d(u, u)
    cauchy = w * (s * jnp.log(dij / gamma) + jnp.log(1 + gamma / dij))
    quant = jnp.log(1 + d(jnp.abs(u), one) / gamma)
    return jnp.mean(cauchy) + lambda1 * jnp.mean(quant)


if __name__ == "__main__":
    # Config mirrors DCHLoss.__init__: gamma, lambda, K=bit, batch from config.
    batch, bit, n_class = 8, 32, 16
    gamma, lambda1 = 20.0, 0.1

    key = jax.random.PRNGKey(0)
    ku, ky = jax.random.split(key)
    u = jax.random.normal(ku, (batch, bit), dtype=jnp.float32)       # hash codes
    labels = jax.random.randint(ky, (batch,), 0, n_class)
    y = jax.nn.one_hot(labels, n_class, dtype=jnp.float32)           # one-hot labels

    loss = dch_loss(u, y, gamma, lambda1)
    jax.block_until_ready(loss)

    ref = _dch_loss_ref(u, y, gamma, lambda1)
    # Tolerance accounts for the EUP approx reciprocal in the cosine divide
    # (per the perf review); any algebra bug would blow far past this.
    assert jnp.allclose(loss, ref, rtol=1e-3, atol=1e-3), (loss, ref)

    print("KERNEL_OK")
</pallas_src>

<mosaic_0001>
module attributes {stable_mosaic.version = 11 : i64} {
  func.func @_dch_kernel(%arg0: i32, %arg1: memref<8x32xf32, #tpu.memory_space<vmem>>, %arg2: memref<8x16xf32, #tpu.memory_space<vmem>>, %arg3: memref<32x8xf32, #tpu.memory_space<vmem>>, %arg4: memref<16x8xf32, #tpu.memory_space<vmem>>, %arg5: memref<1x8xf32, #tpu.memory_space<vmem>>, %arg6: memref<1x4x8xf32, #tpu.memory_space<vmem>>) attributes {dimension_semantics = [#tpu.dimension_semantics<parallel>], iteration_bounds = array<i64: 1>, scalar_prefetch = 0 : i64, scratch_operands = 0 : i64, tpu.core_type = #tpu.core_type<tc>, window_params = [{transform_indices = @transform_0, window_bounds = array<i64: 8, 32>}, {transform_indices = @transform_1, window_bounds = array<i64: 8, 16>}, {pipeline_mode = #tpu.pipeline_mode<synchronous>, transform_indices = @transform_2, window_bounds = array<i64: 32, 8>}, {pipeline_mode = #tpu.pipeline_mode<synchronous>, transform_indices = @transform_3, window_bounds = array<i64: 16, 8>}, {pipeline_mode = #tpu.pipeline_mode<synchronous>, transform_indices = @transform_4, window_bounds = array<i64: 1, 8>}, {transform_indices = @transform_5, window_bounds = array<i64: 1, 4, 8>}]} {
    %c0 = arith.constant 0 : index
    %c0_0 = arith.constant 0 : index
    %0 = vector.load %arg1[%c0, %c0_0] : memref<8x32xf32, #tpu.memory_space<vmem>>, vector<8x32xf32>
    %c0_1 = arith.constant 0 : index
    %c0_2 = arith.constant 0 : index
    %1 = vector.load %arg2[%c0_1, %c0_2] : memref<8x16xf32, #tpu.memory_space<vmem>>, vector<8x16xf32>
    %c0_3 = arith.constant 0 : index
    %c0_4 = arith.constant 0 : index
    %2 = vector.load %arg3[%c0_3, %c0_4] : memref<32x8xf32, #tpu.memory_space<vmem>>, vector<32x8xf32>
    %c0_5 = arith.constant 0 : index
    %c0_6 = arith.constant 0 : index
    %3 = vector.load %arg4[%c0_5, %c0_6] : memref<16x8xf32, #tpu.memory_space<vmem>>, vector<16x8xf32>
    %c0_7 = arith.constant 0 : index
    %c0_8 = arith.constant 0 : index
    %4 = vector.load %arg5[%c0_7, %c0_8] : memref<1x8xf32, #tpu.memory_space<vmem>>, vector<1x8xf32>
    %cst = arith.constant 2.000000e+01 : f32
    %5 = math.log %cst : f32
    %cst_9 = arith.constant 3.200000e+01 : f32
    %cst_10 = arith.constant 5.000000e-01 : f32
    %6 = arith.mulf %cst_9, %cst_10 : f32
    %cst_11 = arith.constant dense<0.000000e+00> : vector<8x8xf32>
    %7 = tpu.matmul %1, %3, %cst_11 {dimension_numbers = #tpu.dot_dimension_numbers<[1], [0], [0], [1], [0, 0, 1, 1], [], []>} : vector<8x16xf32>, vector<16x8xf32>, vector<8x8xf32> -> vector<8x8xf32>
    %cst_12 = arith.constant 0.000000e+00 : f32
    %8 = vector.broadcast %cst_12 : f32 to vector<8x8xf32>
    %9 = arith.cmpf ogt, %7, %8 : vector<8x8xf32>
    %10 = arith.extui %9 : vector<8x8xi1> to vector<8x8xi32>
    %11 = arith.sitofp %10 : vector<8x8xi32> to vector<8x8xf32>
    %cst_13 = arith.constant dense<0.000000e+00> : vector<8x8xf32>
    %12 = tpu.matmul %0, %2, %cst_13 {dimension_numbers = #tpu.dot_dimension_numbers<[1], [0], [0], [1], [0, 0, 1, 1], [], []>} : vector<8x32xf32>, vector<32x8xf32>, vector<8x8xf32> -> vector<8x8xf32>
    %13 = arith.mulf %0, %0 : vector<8x32xf32>
    %cst_14 = arith.constant dense<0.000000e+00> : vector<8xf32>
    %14 = vector.multi_reduction <add>, %13, %cst_14 [1] : vector<8x32xf32> to vector<8xf32>
    %15 = vector.shape_cast %14 : vector<8xf32> to vector<8x1xf32>
    %16 = math.sqrt %15 : vector<8x1xf32>
    %17 = vector.broadcast %16 : vector<8x1xf32> to vector<8x8xf32>
    %18 = vector.broadcast %4 : vector<1x8xf32> to vector<8x8xf32>
    %19 = arith.mulf %17, %18 : vector<8x8xf32>
    %cst_15 = arith.constant 9.99999974E-5 : f32
    %20 = vector.broadcast %cst_15 : f32 to vector<8x8xf32>
    %21 = arith.maximumf %19, %20 : vector<8x8xf32>
    %22 = tpu.reciprocal %21 {approx = true} : vector<8x8xf32> -> vector<8x8xf32>
    %23 = arith.mulf %12, %22 : vector<8x8xf32>
    %cst_16 = arith.constant 9.900000e-01 : f32
    %24 = vector.broadcast %cst_16 : f32 to vector<8x8xf32>
    %25 = arith.minimumf %23, %24 : vector<8x8xf32>
    %cst_17 = arith.constant 1.000000e+00 : f32
    %26 = vector.broadcast %cst_17 : f32 to vector<8x8xf32>
    %27 = arith.subf %26, %25 : vector<8x8xf32>
    %28 = vector.broadcast %6 : f32 to vector<8x8xf32>
    %29 = arith.mulf %27, %28 : vector<8x8xf32>
    %cst_18 = arith.constant 1.000000e+00 : f32
    %30 = vector.broadcast %cst_18 : f32 to vector<8x8xf32>
    %31 = arith.subf %11, %30 : vector<8x8xf32>
    %32 = math.log %29 : vector<8x8xf32>
    %33 = arith.mulf %31, %32 : vector<8x8xf32>
    %cst_19 = arith.constant 2.000000e+01 : f32
    %34 = vector.broadcast %cst_19 : f32 to vector<8x8xf32>
    %35 = arith.addf %29, %34 : vector<8x8xf32>
    %36 = math.log %35 : vector<8x8xf32>
    %37 = arith.addf %33, %36 : vector<8x8xf32>
    %38 = vector.broadcast %5 : f32 to vector<8x8xf32>
    %39 = arith.mulf %11, %38 : vector<8x8xf32>
    %40 = arith.subf %37, %39 : vector<8x8xf32>
    %41 = math.absf %0 : vector<8x32xf32>
    %cst_20 = arith.constant dense<0.000000e+00> : vector<8xf32>
    %42 = vector.multi_reduction <add>, %41, %cst_20 [1] : vector<8x32xf32> to vector<8xf32>
    %43 = vector.shape_cast %42 : vector<8xf32> to vector<8x1xf32>
    %cst_21 = arith.constant 3.200000e+01 : f32
    %44 = math.sqrt %cst_21 : f32
    %45 = vector.broadcast %44 : f32 to vector<8x1xf32>
    %46 = arith.mulf %16, %45 : vector<8x1xf32>
    %cst_22 = arith.constant 9.99999974E-5 : f32
    %47 = vector.broadcast %cst_22 : f32 to vector<8x1xf32>
    %48 = arith.maximumf %46, %47 : vector<8x1xf32>
    %49 = tpu.reciprocal %48 {approx = true} : vector<8x1xf32> -> vector<8x1xf32>
    %50 = arith.mulf %43, %49 : vector<8x1xf32>
    %cst_23 = arith.constant 9.900000e-01 : f32
    %51 = vector.broadcast %cst_23 : f32 to vector<8x1xf32>
    %52 = arith.minimumf %50, %51 : vector<8x1xf32>
    %cst_24 = arith.constant 1.000000e+00 : f32
    %53 = vector.broadcast %cst_24 : f32 to vector<8x1xf32>
    %54 = arith.subf %53, %52 : vector<8x1xf32>
    %55 = vector.broadcast %6 : f32 to vector<8x1xf32>
    %56 = arith.mulf %54, %55 : vector<8x1xf32>
    %cst_25 = arith.constant 2.000000e+01 : f32
    %57 = vector.broadcast %cst_25 : f32 to vector<8x1xf32>
    %58 = arith.addf %56, %57 : vector<8x1xf32>
    %59 = math.log %58 : vector<8x1xf32>
    %60 = vector.broadcast %5 : f32 to vector<8x1xf32>
    %61 = arith.subf %59, %60 : vector<8x1xf32>
    %cst_26 = arith.constant dense<0.000000e+00> : vector<8xf32>
    %62 = vector.multi_reduction <add>, %11, %cst_26 [0] : vector<8x8xf32> to vector<8xf32>
    %63 = vector.shape_cast %62 : vector<8xf32> to vector<1x8xf32>
    %cst_27 = arith.constant dense<0.000000e+00> : vector<8xf32>
    %64 = vector.multi_reduction <add>, %40, %cst_27 [0] : vector<8x8xf32> to vector<8xf32>
    %65 = vector.shape_cast %64 : vector<8xf32> to vector<1x8xf32>
    %66 = arith.mulf %11, %40 : vector<8x8xf32>
    %cst_28 = arith.constant dense<0.000000e+00> : vector<8xf32>
    %67 = vector.multi_reduction <add>, %66, %cst_28 [0] : vector<8x8xf32> to vector<8xf32>
    %68 = vector.shape_cast %67 : vector<8xf32> to vector<1x8xf32>
    %69 = vector.shape_cast %61 : vector<8x1xf32> to vector<1x8x1xf32>
    %cst_29 = arith.constant dense<0.000000e+00> : vector<1xf32>
    %70 = vector.multi_reduction <add>, %69, %cst_29 [1, 2] : vector<1x8x1xf32> to vector<1xf32>
    %71 = vector.shape_cast %70 : vector<1xf32> to vector<1x1x1xf32>
    %72 = vector.extract %71[0, 0, 0] : f32 from vector<1x1x1xf32>
    %73 = tpu.iota {dimensions = array<i32: 1>} : vector<1x8xi32>
    %c0_i32 = arith.constant 0 : i32
    %74 = vector.broadcast %c0_i32 : i32 to vector<1x8xi32>
    %75 = arith.cmpi eq, %73, %74 : vector<1x8xi32>
    %cst_30 = arith.constant 0.000000e+00 : f32
    %76 = vector.broadcast %72 : f32 to vector<1x8xf32>
    %77 = vector.broadcast %cst_30 : f32 to vector<1x8xf32>
    %78 = arith.select %75, %76, %77 : vector<1x8xi1>, vector<1x8xf32>
    %79 = tpu.iota {dimensions = array<i32: 0>} : vector<4x8xi32>
    %c0_i32_31 = arith.constant 0 : i32
    %80 = vector.broadcast %c0_i32_31 : i32 to vector<4x8xi32>
    %81 = arith.cmpi eq, %79, %80 : vector<4x8xi32>
    %c1_i32 = arith.constant 1 : i32
    %82 = vector.broadcast %c1_i32 : i32 to vector<4x8xi32>
    %83 = arith.cmpi eq, %79, %82 : vector<4x8xi32>
    %c2_i32 = arith.constant 2 : i32
    %84 = vector.broadcast %c2_i32 : i32 to vector<4x8xi32>
    %85 = arith.cmpi eq, %79, %84 : vector<4x8xi32>
    %86 = vector.shape_cast %68 : vector<1x8xf32> to vector<1x8xf32>
    %87 = vector.broadcast %86 : vector<1x8xf32> to vector<4x8xf32>
    %88 = vector.shape_cast %78 : vector<1x8xf32> to vector<1x8xf32>
    %89 = vector.broadcast %88 : vector<1x8xf32> to vector<4x8xf32>
    %90 = arith.select %85, %87, %89 : vector<4x8xi1>, vector<4x8xf32>
    %91 = vector.shape_cast %65 : vector<1x8xf32> to vector<1x8xf32>
    %92 = vector.broadcast %91 : vector<1x8xf32> to vector<4x8xf32>
    %93 = arith.select %83, %92, %90 : vector<4x8xi1>, vector<4x8xf32>
    %94 = vector.shape_cast %63 : vector<1x8xf32> to vector<1x8xf32>
    %95 = vector.broadcast %94 : vector<1x8xf32> to vector<4x8xf32>
    %96 = arith.select %81, %95, %93 : vector<4x8xi1>, vector<4x8xf32>
    %97 = vector.shape_cast %96 : vector<4x8xf32> to vector<1x4x8xf32>
    %c0_32 = arith.constant 0 : index
    %c0_33 = arith.constant 0 : index
    %c0_34 = arith.constant 0 : index
    %98 = vector.load %arg6[%c0_32, %c0_33, %c0_34] : memref<1x4x8xf32, #tpu.memory_space<vmem>>, vector<1x4x8xf32>
    tpu.vector_store %arg6[%c0_32, %c0_33, %c0_34], %97 {strides = array<i32>} : memref<1x4x8xf32, #tpu.memory_space<vmem>>, vector<1x4x8xf32>,
    return
  }
  func.func @transform_0(%arg0: i32) -> (i32, i32) {
    %c0_i32 = arith.constant 0 : i32
    %c0_i32_0 = arith.constant 0 : i32
    return %arg0, %c0_i32 : i32, i32
  }
  func.func @transform_1(%arg0: i32) -> (i32, i32) {
    %c0_i32 = arith.constant 0 : i32
    %c0_i32_0 = arith.constant 0 : i32
    return %arg0, %c0_i32 : i32, i32
  }
  func.func @transform_2(%arg0: i32) -> (i32, i32) {
    %c0_i32 = arith.constant 0 : i32
    %c0_i32_0 = arith.constant 0 : i32
    %c0_i32_1 = arith.constant 0 : i32
    return %c0_i32, %c0_i32_0 : i32, i32
  }
  func.func @transform_3(%arg0: i32) -> (i32, i32) {
    %c0_i32 = arith.constant 0 : i32
    %c0_i32_0 = arith.constant 0 : i32
    %c0_i32_1 = arith.constant 0 : i32
    return %c0_i32, %c0_i32_0 : i32, i32
  }
  func.func @transform_4(%arg0: i32) -> (i32, i32) {
    %c0_i32 = arith.constant 0 : i32
    %c0_i32_0 = arith.constant 0 : i32
    %c0_i32_1 = arith.constant 0 : i32
    return %c0_i32, %c0_i32_0 : i32, i32
  }
  func.func @transform_5(%arg0: i32) -> (i32, i32, i32) {
    %c0_i32 = arith.constant 0 : i32
    %c0_i32_0 = arith.constant 0 : i32
    %c0_i32_1 = arith.constant 0 : i32
    return %arg0, %c0_i32, %c0_i32_0 : i32, i32, i32
  }
}

</mosaic_0001>

<llo_original>
// kernel: tpu_custom_call.1
$region0: #{tpu_custom_call.1}
  #allocation0 [shape = 'u32[]', space=smem, size = 0x4, offset = 0x4, fixed_abs, tag = 'smem constant byte address 0x4 - core index']
  #allocation1 [shape = 'u32[144,128]{1,0:T(1,128)}', space=vmem, size = 0x12000, scoped, tag = 'internal scratch']
  %s0 = inlined_call_operand.vmem [shape: f32[8,32], index: 0, kind: input, shape index: {}]
  %s1 = inlined_call_operand.vmem [shape: f32[8,16], index: 1, kind: input, shape index: {}]
  %s2 = inlined_call_operand.vmem [shape: f32[32,8], index: 2, kind: input, shape index: {}]
  %s3 = inlined_call_operand.vmem [shape: f32[16,8], index: 3, kind: input, shape index: {}]
  %s4 = inlined_call_operand.vmem [shape: f32[1,8], index: 4, kind: input, shape index: {}]
  %s5 = inlined_call_operand.hbm [shape: f32[1,4,8], index: 5, kind: output, shape index: {}]
  %s6 = sld [smem:[#allocation0]]
  $region30: #{tpu_custom_call.1} parent=0
    _
  %s8 = ssub.s32 1, %s6
  %s9 = scalar_select 0, %s8, %s6
  $region1: #{tpu_custom_call.1} parent=0
    #allocation2 [shape = 'u8[2048]{0}', space=vmem, size = 0x800, scoped, tag = 'output window, operand 0, single buffered']
    #allocation3 [shape = 's32[1]{0}', space=sflag, size = 0x4, scoped, tag = 'scoped memory for tpu_custom_call.1']
    %10 = vsyncpa [#allocation3], 0
    // Predicated region
    $region2: #{tpu_custom_call.1} parent=1 // pred_check
      _
    $region3: #{tpu_custom_call.1} parent=1 // pred_check_branch
      %12 = sbr.rel (0) target = $region5
    $region4: #{tpu_custom_call.1} parent=1 // pred_region
      _
    $region5: #{tpu_custom_call.1} parent=1 // pred_fallthru
      _
    // Predicated region
    $region6: #{tpu_custom_call.1} parent=1 // pred_check
      _
    $region7: #{tpu_custom_call.1} parent=1 // pred_check_branch
      %14 = sbr.rel (0) target = $region9
    $region8: #{tpu_custom_call.1} parent=1 // pred_region
      _
    $region9: #{tpu_custom_call.1} parent=1 // pred_fallthru
      _
    // Predicated region
    $region10: #{tpu_custom_call.1} parent=1 // pred_check
      _
    $region11: #{tpu_custom_call.1} parent=1 // pred_check_branch
      %16 = sbr.rel (0) target = $region13
    $region12: #{tpu_custom_call.1} parent=1 // pred_region
      _
    $region13: #{tpu_custom_call.1} parent=1 // pred_fallthru
      _
    // Predicated region
    $region14: #{tpu_custom_call.1} parent=1 // pred_check
      _
    $region15: #{tpu_custom_call.1} parent=1 // pred_check_branch
      %18 = sbr.rel (0) target = $region17
    $region16: #{tpu_custom_call.1} parent=1 // pred_region
      _
    $region17: #{tpu_custom_call.1} parent=1 // pred_fallthru
      _
    // Predicated region
    $region18: #{tpu_custom_call.1} parent=1 // pred_check
      _
    $region19: #{tpu_custom_call.1} parent=1 // pred_check_branch
      %20 = sbr.rel (0) target = $region21
    $region20: #{tpu_custom_call.1} parent=1 // pred_region
      _
    $region21: #{tpu_custom_call.1} parent=1 // pred_fallthru
      _
    %v21 = vld [vmem:[%s0] sm:$0xff]
    %v22 = vld [vmem:[%s1] sm:$0xff]
    %v23 = vld [vmem:[%s2] sm:$0xff]
    %v24 = vld [vmem:[%s2 + $0x8] sm:$0xff]
    %v25 = vld [vmem:[%s2 + $0x10] sm:$0xff]
    %v26 = vld [vmem:[%s2 + $0x18] sm:$0xff]
    %v27 = vld [vmem:[%s3] sm:$0xff]
    %v28 = vld [vmem:[%s3 + $0x8] sm:$0xff]
    %v29 = vld [vmem:[%s4] sm:$0x1]
    %vm30 = vcmask 130048
    %v32 = vsel %vm30, %v22, 0
    %34 = vmatprep.subr.mxu0 0.0
    %35 = vmatpush1.msra.mxu0 %v27
    %36 = vmatprep.subr.mxu0 0.0
    %37 = vmatpush1.msra.mxu0 %v28
    %38 = vmatprep.subr.mxu0 0.0
    %39 = vmatpush1.msra.mxu0 0.0
    %40 = vmatprep.subr.mxu0 0.0
    %41 = vmatpush1.msra.mxu0 0.0
    %42 = vmatprep.subr.mxu0 0.0
    %43 = vmatpush1.msra.mxu0 0.0
    %44 = vmatprep.subr.mxu0 0.0
    %45 = vmatpush1.msra.mxu0 0.0
    %46 = vmatprep.subr.mxu0 0.0
    %47 = vmatpush1.msra.mxu0 0.0
    %48 = vmatprep.subr.mxu0 0.0
    %49 = vmatpush1.msra.mxu0 0.0
    %50 = vmatprep.subr.mxu0 0.0
    %51 = vmatpush1.msra.mxu0 0.0
    %52 = vmatprep.subr.mxu0 0.0
    %53 = vmatpush1.msra.mxu0 0.0
    %54 = vmatprep.subr.mxu0 0.0
    %55 = vmatpush1.msra.mxu0 0.0
    %56 = vmatprep.subr.mxu0 0.0
    %57 = vmatpush1.msra.mxu0 0.0
    %58 = vmatprep.subr.mxu0 0.0
    %59 = vmatpush1.msra.mxu0 0.0
    %60 = vmatprep.subr.mxu0 0.0
    %61 = vmatpush1.msra.mxu0 0.0
    %62 = vmatprep.subr.mxu0 0.0
    %63 = vmatpush1.msra.mxu0 0.0
    %64 = vmatprep.subr.mxu0 0.0
    %65 = vmatpush1.msra.mxu0 0.0
    %66 = vmatprep.subr.mxu0 0.0
    %67 = vmatpush1.msra.mxu0 0.0
    %68 = vmatprep.subr.mxu0 0.0
    %69 = vmatpush1.msra.mxu0 0.0
    %70 = vmatprep.subr.mxu0 0.0
    %71 = vmatpush1.msra.mxu0 0.0
    %72 = vmatprep.subr.mxu0 0.0
    %73 = vmatpush1.msra.mxu0 0.0
    %74 = vmatprep.subr.mxu0 0.0
    %75 = vmatpush1.msra.mxu0 0.0
    %76 = vmatprep.subr.mxu0 0.0
    %77 = vmatpush1.msra.mxu0 0.0
    %78 = vmatprep.subr.mxu0 0.0
    %79 = vmatpush1.msra.mxu0 0.0
    %80 = vmatprep.subr.mxu0 0.0
    %81 = vmatpush1.msra.mxu0 0.0
    %82 = vmatprep.subr.mxu0 0.0
    %83 = vmatpush1.msra.mxu0 0.0
    %84 = vmatprep.subr.mxu0 0.0
    %85 = vmatpush1.msra.mxu0 0.0
    %86 = vmatprep.subr.mxu0 0.0
    %87 = vmatpush1.msra.mxu0 0.0
    %88 = vmatprep.subr.mxu0 0.0
    %89 = vmatpush1.msra.mxu0 0.0
    %90 = vmatprep.subr.mxu0 0.0
    %91 = vmatpush1.msra.mxu0 0.0
    %92 = vmatprep.subr.mxu0 0.0
    %93 = vmatpush1.msra.mxu0 0.0
    %94 = vmatprep.subr.mxu0 0.0
    %95 = vmatpush1.msra.mxu0 0.0
    %96 = vmatprep.subr.mxu0 0.0
    %97 = vmatpush1.msra.mxu0 0.0
    %98 = vmatprep.mubr.f32.mxu0 0.0
    %99 = vmatmul.mubr.f32.gmra.mrb[0].mxu0 %v32
    %v100 = vpop.f32.mrb[0].mxu0
    %v101 = vadd.f32 0.0, %v100
    %v102 = vpop.f32.mrb[0].mxu0
    %103 = vdwg.mxu0
    %vm104 = vcmp.gt.f32.partialorder %v101, 0.0
    %v105 = vsel %vm104, 1, 0
    %v106 = vcvt.s32.f32 %v105
    %vm107 = vcmask 261120
    %v109 = vsel %vm107, %v21, 0
    %111 = vmatprep.subr.mxu0 0.0
    %112 = vmatpush1.msra.mxu0 %v23
    %113 = vmatprep.subr.mxu0 0.0
    %114 = vmatpush1.msra.mxu0 %v24
    %115 = vmatprep.subr.mxu0 0.0
    %116 = vmatpush1.msra.mxu0 %v25
    %117 = vmatprep.subr.mxu0 0.0
    %118 = vmatpush1.msra.mxu0 %v26
    %119 = vmatprep.subr.mxu0 0.0
    %120 = vmatpush1.msra.mxu0 0.0
    %121 = vmatprep.subr.mxu0 0.0
    %122 = vmatpush1.msra.mxu0 0.0
    %123 = vmatprep.subr.mxu0 0.0
    %124 = vmatpush1.msra.mxu0 0.0
    %125 = vmatprep.subr.mxu0 0.0
    %126 = vmatpush1.msra.mxu0 0.0
    %127 = vmatprep.subr.mxu0 0.0
    %128 = vmatpush1.msra.mxu0 0.0
    %129 = vmatprep.subr.mxu0 0.0
    %130 = vmatpush1.msra.mxu0 0.0
    %131 = vmatprep.subr.mxu0 0.0
    %132 = vmatpush1.msra.mxu0 0.0
    %133 = vmatprep.subr.mxu0 0.0
    %134 = vmatpush1.msra.mxu0 0.0
    %135 = vmatprep.subr.mxu0 0.0
    %136 = vmatpush1.msra.mxu0 0.0
    %137 = vmatprep.subr.mxu0 0.0
    %138 = vmatpush1.msra.mxu0 0.0
    %139 = vmatprep.subr.mxu0 0.0
    %140 = vmatpush1.msra.mxu0 0.0
    %141 = vmatprep.subr.mxu0 0.0
    %142 = vmatpush1.msra.mxu0 0.0
    %143 = vmatprep.subr.mxu0 0.0
    %144 = vmatpush1.msra.mxu0 0.0
    %145 = vmatprep.subr.mxu0 0.0
    %146 = vmatpush1.msra.mxu0 0.0
    %147 = vmatprep.subr.mxu0 0.0
    %148 = vmatpush1.msra.mxu0 0.0
    %149 = vmatprep.subr.mxu0 0.0
    %150 = vmatpush1.msra.mxu0 0.0
    %151 = vmatprep.subr.mxu0 0.0
    %152 = vmatpush1.msra.mxu0 0.0
    %153 = vmatprep.subr.mxu0 0.0
    %154 = vmatpush1.msra.mxu0 0.0
    %155 = vmatprep.subr.mxu0 0.0
    %156 = vmatpush1.msra.mxu0 0.0
    %157 = vmatprep.subr.mxu0 0.0
    %158 = vmatpush1.msra.mxu0 0.0
    %159 = vmatprep.subr.mxu0 0.0
    %160 = vmatpush1.msra.mxu0 0.0
    %161 = vmatprep.subr.mxu0 0.0
    %162 = vmatpush1.msra.mxu0 0.0
    %163 = vmatprep.subr.mxu0 0.0
    %164 = vmatpush1.msra.mxu0 0.0
    %165 = vmatprep.subr.mxu0 0.0
    %166 = vmatpush1.msra.mxu0 0.0
    %167 = vmatprep.subr.mxu0 0.0
    %168 = vmatpush1.msra.mxu0 0.0
    %169 = vmatprep.subr.mxu0 0.0
    %170 = vmatpush1.msra.mxu0 0.0
    %171 = vmatprep.subr.mxu0 0.0
    %172 = vmatpush1.msra.mxu0 0.0
    %173 = vmatprep.subr.mxu0 0.0
    %174 = vmatpush1.msra.mxu0 0.0
    %175 = vmatprep.mubr.f32.mxu0 0.0
    %176 = vmatmul.mubr.f32.gmra.mrb[0].mxu0 %v109
    %v177 = vpop.f32.mrb[0].mxu0
    %v178 = vadd.f32 0.0, %v177
    %v179 = vpop.f32.mrb[0].mxu0
    %180 = vdwg.mxu0
    %v181 = vmul.f32 %v21, %v21
    %v182 = vsel %vm107, %v181, 0.0
    %183 = vadd.xlane.f32.xlu0 %v182
    %v184 = vpop.xlane.xlu0 %183
    %v185 = vrsqrt.pop %v184
    %v186 = vmul.f32 %v184, %v185
    %vm187 = vcmp.eq.f32.partialorder %v184, inf
    %v188 = vsel %vm187, %v184, %v186
    %vm189 = vcmp.eq.f32.partialorder %v184, 0.0
    %v190 = vand.u32 %v184, 2147483648
    %v191 = vsel %vm189, %v190, %v188
    %v193 = vlaneseq
    %v194 = vshrl.u32 %v193, 7
    %v195 = vsub.s32 0, %v194
    %v196 = vrot.slane %v29, %v195
    %v198 = vmul.f32 %v191, %v196
    %v199 = vmax.f32 %v198, 0.0001
    %v200 = vrcp.pop %v199
    %v201 = vmul.f32 %v178, %v200
    %v202 = vmin.f32 %v201, 0.99
    %v203 = vsub.f32 1.0, %v202
    %v204 = vmul.f32 %v203, 16.0
    %v205 = vsub.f32 %v106, 1.0
    %v206 = vlog2.pop %v204
    %v207 = vmul.f32 %v206, 0.6931472
    %v208 = vmul.f32 %v205, %v207
    %v209 = vadd.f32 %v204, 20.0
    %v210 = vlog2.pop %v209
    %v211 = vmul.f32 %v210, 0.6931472
    %v212 = vadd.f32 %v208, %v211
    %v213 = vmul.f32 %v106, 2.9957323
    %v214 = vsub.f32 %v212, %v213
    %v215 = vand.u32 2147483647, %v21
    %v216 = vsel %vm107, %v215, 0.0
    %217 = vadd.xlane.f32.xlu0 %v216
    %v218 = vpop.xlane.xlu0 %217
    %v219 = vmul.f32 %v191, 5.656854
    %v220 = vmax.f32 %v219, 0.0001
    %v221 = vrcp.pop %v220
    %v222 = vmul.f32 %v218, %v221
    %v223 = vmin.f32 %v222, 0.99
    %v224 = vsub.f32 1.0, %v223
    %v225 = vmul.f32 %v224, 16.0
    %v226 = vadd.f32 %v225, 20.0
    %v227 = vlog2.pop %v226
    %v228 = vmul.f32 %v227, 0.6931472
    %v229 = vsub.f32 %v228, 2.9957323
    %vm230 = vcmask 64512
    %v231 = vsel %vm230, %v106, 0.0
    %v232 = vrot.slane %v231, 4
    %v233 = vadd.f32 %v231, %v232
    %v234 = vrot.slane %v233, 2
    %v235 = vadd.f32 %v233, %v234
    %v236 = vrot.slane %v235, 1
    %v237 = vadd.f32 %v235, %v236
    %v238 = vsel %vm230, %v214, 0.0
    %v239 = vrot.slane %v238, 4
    %v240 = vadd.f32 %v238, %v239
    %v241 = vrot.slane %v240, 2
    %v242 = vadd.f32 %v240, %v241
    %v243 = vrot.slane %v242, 1
    %v244 = vadd.f32 %v242, %v243
    %v245 = vmul.f32 %v106, %v214
    %v246 = vsel %vm230, %v245, 0.0
    %v247 = vrot.slane %v246, 4
    %v248 = vadd.f32 %v246, %v247
    %v249 = vrot.slane %v248, 2
    %v250 = vadd.f32 %v248, %v249
    %v251 = vrot.slane %v250, 1
    %v252 = vadd.f32 %v250, %v251
    %vm253 = vcmask 7168
    %v254 = vsel %vm253, %v229, 0.0
    %255 = vadd.xlane.f32.xlu0 %v254
    %v256 = vpop.xlane.xlu0 %255
    %v257 = vrot.slane %v256, 4
    %v258 = vadd.f32 %v256, %v257
    %v259 = vrot.slane %v258, 2
    %v260 = vadd.f32 %v258, %v259
    %v261 = vrot.slane %v260, 1
    %v262 = vadd.f32 %v260, %v261
    %s263 = vtos %v262
    %v264 = vlaneseq
    %v265 = vand.u32 %v264, 127
    %vm266 = vcmp.eq.s32.totalorder %v265, 0
    %v267 = vstv %s263
    %v268 = vsel %vm266, %v267, 0.0
    %v269 = vlaneseq
    %v270 = vshrl.u32 %v269, 7
    %vm271 = vcmp.eq.s32.totalorder %v270, 0
    %vm272 = vcmp.eq.s32.totalorder %v270, 1
    %vm273 = vcmp.eq.s32.totalorder %v270, 2
    %v274 = vsel %vm273, %v252, %v268
    %v275 = vsel %vm272, %v244, %v274
    %v276 = vsel %vm271, %v237, %v275
    %vm277 = vcmask 60416
    %278 = vst.msk [vmem:[#allocation2] sm:$0xf] %vm277, %v276
    // Predicated region
    $region22: #{tpu_custom_call.1} parent=1 // pred_check
      _
    $region23: #{tpu_custom_call.1} parent=1 // pred_check_branch
      %280 = sbr.rel (0) target = $region25
    $region24: #{tpu_custom_call.1} parent=1 // pred_region
      %s282 = ssub.s32 64, 64
      %283 = vsyncadd [#allocation3], %s282
      %s285 = sshll.u32 [#allocation2], 4
      %s286 = int_to_ptr.vmem [resolvable:$true] %s285
      %288 = dma.vmem_to_hbm [thread:$0]  %s286, 64, %s5, [#allocation3]
    $region25: #{tpu_custom_call.1} parent=1 // pred_fallthru
      _
    // Predicated region
    $region26: #{tpu_custom_call.1} parent=1 // pred_check
      _
    $region27: #{tpu_custom_call.1} parent=1 // pred_check_branch
      %290 = sbr.rel (0) target = $region29
    $region28: #{tpu_custom_call.1} parent=1 // pred_region
      %291 = dma.done [#allocation3], 64
    $region29: #{tpu_custom_call.1} parent=1 // pred_fallthru
      _
    %292 = vsyncpa [#allocation3], 1

</llo_original>
